<compile_context>
chip_gen: v7x
topology: tpu7x:2x2x1
jax: 0.10.0
libtpu: 0.0.40
codegen_flags: <defaults>
</compile_context>

<pallas_src>
import functools
import math

import jax
import jax.numpy as jnp
import numpy as np
from jax.experimental import pallas as pl
from jax.experimental.pallas import tpu as pltpu

LOG2_E = math.log2(math.e)
_NEG_INF = float("-inf")


def _round_up(x, m):
    return ((x + m - 1) // m) * m


def _num_tensorcores():
    """Best-effort TensorCore count per chip (2 on v7x-class parts, else 1)."""
    try:
        info = pltpu.get_tpu_info()
        for name in ("num_cores", "core_count", "num_tensorcores",
                     "num_tensor_cores", "tensorcore_count"):
            v = getattr(info, name, None)
            if v is not None:
                try:
                    v = int(v)
                except Exception:
                    continue
                if v > 0:
                    return v
    except Exception:
        pass
    return 1


def _mine_kernel(xy_ref, w1j_ref, w1m_ref, b1_ref, w2_ref, b2_ref, w3_ref,
                 out_ref,                                  # (1, 1, 128) f32
                 hsum_acc, m_acc, l_acc,                   # VMEM scratch
                 *, sample_size, tile_rows, tiles_per_shard):
    shard = pl.program_id(0)
    k = pl.program_id(1)
    # Global row offset of this tile, UNclamped: used to skip out-of-range /
    # duplicated (index_map-clamped) tiles and to mask the boundary tile.
    row0 = (shard * tiles_per_shard + k) * tile_rows

    @pl.when(k == 0)
    def _init():
        hsum_acc[...] = jnp.zeros_like(hsum_acc)
        m_acc[...] = jnp.full_like(m_acc, _NEG_INF)
        l_acc[...] = jnp.zeros_like(l_acc)

    @pl.when(row0 < sample_size)
    def _compute():
        mxu = w2_ref.dtype                                 # bf16 or f32
        b1 = b1_ref[...]                                   # (1, Hp) f32
        b2 = b2_ref[...]
        xy = xy_ref[...]                                   # (rows, feat_p) mxu

        # Layer 1: one packed input stream, two block-weight matmuls.
        h1_j = jnp.maximum(
            jnp.dot(xy, w1j_ref[...], preferred_element_type=jnp.float32) + b1, 0.0)
        h1_m = jnp.maximum(
            jnp.dot(xy, w1m_ref[...], preferred_element_type=jnp.float32) + b1, 0.0)

        # Layer 2 (lane-dense Hp).
        h2_j = jnp.maximum(
            jnp.dot(h1_j.astype(mxu), w2_ref[...],
                    preferred_element_type=jnp.float32) + b2, 0.0)
        h2_m = jnp.maximum(
            jnp.dot(h1_m.astype(mxu), w2_ref[...],
                    preferred_element_type=jnp.float32) + b2, 0.0)

        # Marginal half needs per-row logits for the streaming LSE.
        logit_m = jnp.sum(h2_m * w3_ref[...], axis=-1, keepdims=True)  # (rows,1)

        def lse_update(lm):
            # Online, max-subtracted log-sum-exp (mask already applied to lm).
            m_old = m_acc[...]                                          # (1, 1)
            t_max = jnp.max(lm, axis=0, keepdims=True)
            m_new = jnp.maximum(m_old, t_max)
            scale = jnp.where(m_old == _NEG_INF, 0.0, jnp.exp(m_old - m_new))
            p_sum = jnp.sum(jnp.exp(lm - m_new), axis=0, keepdims=True)
            l_acc[...] = l_acc[...] * scale + p_sum
            m_acc[...] = m_new

        full = row0 + tile_rows <= sample_size

        @pl.when(full)
        def _fast():                                       # steady state: no mask
            hsum_acc[...] = hsum_acc[...] + jnp.sum(h2_j, axis=0, keepdims=True)
            lse_update(logit_m)

        @pl.when(jnp.logical_not(full))
        def _boundary():                                   # single partial tile
            rows = row0 + jax.lax.broadcasted_iota(jnp.int32, (tile_rows, 1), 0)
            valid = rows < sample_size
            hsum_acc[...] = hsum_acc[...] + jnp.sum(
                jnp.where(valid, h2_j, 0.0), axis=0, keepdims=True)
            # Mask BEFORE exp/reduce so garbage rows never reach a reduction.
            lse_update(jnp.where(valid, logit_m, _NEG_INF))

    @pl.when(k == tiles_per_shard - 1)
    def _finalize():
        # Joint half: one dot with w3 on the accumulated column-sums.  The
        # final bias b3 cancels in the DV bound; re-added in the JAX epilogue.
        s_joint = jnp.sum(hsum_acc[...] * w3_ref[...], axis=-1, keepdims=True)
        lane = jax.lax.broadcasted_iota(jnp.int32, (1, 128), 1)
        vec = jnp.where(lane == 0, s_joint,
              jnp.where(lane == 1, m_acc[...],
              jnp.where(lane == 2, l_acc[...], 0.0)))
        out_ref[...] = vec.reshape(1, 1, 128)


def mine_forward(x_samples, y_samples, params, perm_key, *,
                 tile_rows=2048, mxu_dtype=jnp.bfloat16, num_shards=None):
    """x_samples: (B, x_dim); y_samples: (B, T, y_dim). Returns scalar DV bound."""
    w1, b1, w2, b2, w3, b3 = params
    B, T, y_dim = y_samples.shape
    x_dim = x_samples.shape[-1]
    hidden = w2.shape[0]
    n = B * T                                              # sample_size
    feat_p = x_dim + 2 * y_dim

    # ---- data prep: single packed [x | y | y_shuffle] stream ----
    x_flat = jnp.broadcast_to(x_samples[:, None, :], (B, T, x_dim)).reshape(n, x_dim)
    y_flat = y_samples.reshape(n, y_dim)
    random_index = jax.random.permutation(perm_key, n)
    # TODO(synk): the permutation gather stays as a single XLA gather pass; an
    # in-kernel per-row DMA gather (rows are only a few bytes) would be slower.
    y_shuffle = jnp.take(y_flat, random_index, axis=0)
    xy = jnp.concatenate([x_flat, y_flat, y_shuffle], axis=-1).astype(mxu_dtype)

    # ---- lane-dense hidden padding (exact: all padded entries are zero) ----
    f32 = jnp.float32
    hp = max(128, _round_up(hidden, 128))
    w1f = w1.astype(f32)
    zeros_y = jnp.zeros((y_dim, hidden), f32)
    w1_joint = jnp.concatenate([w1f[:x_dim], w1f[x_dim:], zeros_y], axis=0)
    w1_marg = jnp.concatenate([w1f[:x_dim], zeros_y, w1f[x_dim:]], axis=0)
    pad_h = (0, hp - hidden)
    w1j = jnp.pad(w1_joint, ((0, 0), pad_h)).astype(mxu_dtype)   # (feat_p, Hp)
    w1m = jnp.pad(w1_marg, ((0, 0), pad_h)).astype(mxu_dtype)    # (feat_p, Hp)
    b1p = jnp.pad(b1.astype(f32), pad_h).reshape(1, hp)
    w2p = jnp.pad(w2.astype(f32), (pad_h, pad_h)).astype(mxu_dtype)
    b2p = jnp.pad(b2.astype(f32), pad_h).reshape(1, hp)
    w3p = jnp.pad(w3.astype(f32)[:, 0], pad_h).reshape(1, hp)

    # ---- tile size from a VMEM budget (live f32 temps + dbl-buffered input) ----
    in_bytes = int(np.dtype(mxu_dtype).itemsize)
    vmem_budget = 24 * 1024 * 1024
    per_row_bytes = 6 * hp * 4 + 2 * feat_p * in_bytes
    cap = max(16, vmem_budget // per_row_bytes)
    rows = min(int(tile_rows), int(cap), _round_up(n, 16))
    tile_rows = max(16, (rows // 16) * 16)

    # ---- grid: (shards, row-tiles); shard axis only on multi-TC chips ----
    num_tiles = pl.cdiv(n, tile_rows)
    if num_shards is None:
        num_shards = 2 if (_num_tensorcores() >= 2 and num_tiles >= 2) else 1
    num_shards = int(max(1, min(int(num_shards), num_tiles)))
    tiles_per_shard = pl.cdiv(num_tiles, num_shards)

    def row_map(s, k):
        # Clamp so the DMA never starts past the end of the array; clamped
        # (duplicated) tiles are fully skipped inside the kernel via row0.
        return (jnp.minimum(s * tiles_per_shard + k, num_tiles - 1), 0)

    def const_map(s, k):
        return (0, 0)

    def out_map(s, k):
        return (s, 0, 0)

    kernel = functools.partial(_mine_kernel, sample_size=n,
                               tile_rows=tile_rows,
                               tiles_per_shard=tiles_per_shard)

    cost = pl.CostEstimate(
        flops=int(2 * n * (2 * feat_p * hp + 2 * hp * hp + 3 * hp)),
        transcendentals=int(2 * n),
        bytes_accessed=int(n * feat_p * in_bytes
                           + (2 * feat_p * hp + hp * hp) * in_bytes
                           + 3 * hp * 4 + num_shards * 128 * 4))

    out = pl.pallas_call(
        kernel,
        out_shape=jax.ShapeDtypeStruct((num_shards, 1, 128), jnp.float32),
        grid_spec=pltpu.PrefetchScalarGridSpec(
            num_scalar_prefetch=0,
            grid=(num_shards, tiles_per_shard),
            in_specs=[
                pl.BlockSpec((tile_rows, feat_p), row_map),
                pl.BlockSpec((feat_p, hp), const_map),
                pl.BlockSpec((feat_p, hp), const_map),
                pl.BlockSpec((1, hp), const_map),
                pl.BlockSpec((hp, hp), const_map),
                pl.BlockSpec((1, hp), const_map),
                pl.BlockSpec((1, hp), const_map),
            ],
            out_specs=pl.BlockSpec((1, 1, 128), out_map),
            scratch_shapes=[pltpu.VMEM((1, hp), jnp.float32),   # h2_joint col-sums
                            pltpu.VMEM((1, 1), jnp.float32),    # LSE running max
                            pltpu.VMEM((1, 1), jnp.float32)]),  # LSE running sum
        compiler_params=pltpu.CompilerParams(
            dimension_semantics=("parallel", "arbitrary"),
            vmem_limit_bytes=32 * 1024 * 1024),
        cost_estimate=cost,
    )(xy, w1j, w1m, b1p, w2p, b2p, w3p)

    # ---- tiny JAX epilogue: combine per-shard partials; b3 re-added here ----
    s_parts = out[:, 0, 0]
    m_parts = out[:, 0, 1]
    l_parts = out[:, 0, 2]
    b3s = b3.astype(jnp.float32).reshape(-1)[0]

    m_tot = jnp.max(m_parts)
    shard_scale = jnp.where(m_parts == _NEG_INF, 0.0, jnp.exp(m_parts - m_tot))
    l_tot = jnp.sum(l_parts * shard_scale)
    mean_joint = jnp.sum(s_parts) / n + b3s
    log_mean_exp = b3s + m_tot + jnp.log(l_tot) - jnp.log(jnp.float32(n))
    return LOG2_E * (mean_joint - log_mean_exp)


def init_params(key, x_dim, y_dim, hidden_size):
    """Deterministic PyTorch-style (uniform +-1/sqrt(fan_in)) init."""
    def linear(k, fan_in, fan_out):
        kw, kb = jax.random.split(k)
        bound = 1.0 / math.sqrt(fan_in)
        w = jax.random.uniform(kw, (fan_in, fan_out), jnp.float32, -bound, bound)
        b = jax.random.uniform(kb, (fan_out,), jnp.float32, -bound, bound)
        return w, b

    k1, k2, k3 = jax.random.split(key, 3)
    w1, b1 = linear(k1, x_dim + y_dim, hidden_size)
    w2, b2 = linear(k2, hidden_size, hidden_size)
    w3, b3 = linear(k3, hidden_size, 1)
    return (w1, b1, w2, b2, w3, b3)


def mine_forward_ref(x_samples, y_samples, params, perm_key):
    """Pure-JAX f32 reference for correctness checking."""
    w1, b1, w2, b2, w3, b3 = params
    B, T, y_dim = y_samples.shape
    x_dim = x_samples.shape[-1]
    x_flat = jnp.broadcast_to(x_samples[:, None, :], (B, T, x_dim)).reshape(-1, x_dim)
    y_flat = y_samples.reshape(-1, y_dim)
    n = y_flat.shape[0]
    tiled_x = jnp.concatenate([x_flat, x_flat], axis=0)
    y_shuffle = y_flat[jax.random.permutation(perm_key, n)]
    concat_y = jnp.concatenate([y_flat, y_shuffle], axis=0)
    inputs = jnp.concatenate([tiled_x, concat_y], axis=-1)
    h = jnp.maximum(inputs @ w1 + b1, 0.0)
    h = jnp.maximum(h @ w2 + b2, 0.0)
    logits = h @ w3 + b3
    return LOG2_E * (jnp.mean(logits[:n]) - jnp.log(jnp.mean(jnp.exp(logits[n:]))))


if __name__ == "__main__":
    key = jax.random.PRNGKey(0)
    kx, ky, kp, kperm = jax.random.split(key, 4)

    x_dim, y_dim, hidden = 4, 4, 32
    params = init_params(kp, x_dim, y_dim, hidden)

    fwd_f32 = jax.jit(functools.partial(mine_forward, tile_rows=16,
                                        mxu_dtype=jnp.float32))
    fwd_f32_2s = jax.jit(functools.partial(mine_forward, tile_rows=16,
                                           mxu_dtype=jnp.float32, num_shards=2))
    fwd_bf16 = jax.jit(functools.partial(mine_forward, mxu_dtype=jnp.bfloat16))
    ref_fn = jax.jit(mine_forward_ref)

    # 1) Small config (single tile / single shard), f32 path, tight check.
    B1, T1 = 2, 8
    x1 = jax.random.normal(kx, (B1, x_dim), jnp.float32)
    y1 = jax.random.normal(ky, (B1, T1, y_dim), jnp.float32)
    lb1 = jax.block_until_ready(fwd_f32(x1, y1, params, kperm))
    ref1 = jax.block_until_ready(ref_fn(x1, y1, params, kperm))
    np.testing.assert_allclose(np.asarray(lb1), np.asarray(ref1),
                               rtol=2e-5, atol=2e-5)

    # 2) Multi-tile config with a forced 2-shard split: exercises streaming
    #    LSE across tiles, the clamped duplicate-tile skip, the boundary-tile
    #    row mask, and the cross-shard epilogue on any chip generation.
    B2, T2 = 2, 37
    x2 = jax.random.normal(kx, (B2, x_dim), jnp.float32)
    y2 = jax.random.normal(ky, (B2, T2, y_dim), jnp.float32)
    lb2 = jax.block_until_ready(fwd_f32_2s(x2, y2, params, kperm))
    ref2 = jax.block_until_ready(ref_fn(x2, y2, params, kperm))
    np.testing.assert_allclose(np.asarray(lb2), np.asarray(ref2),
                               rtol=2e-5, atol=2e-5)

    # 3) Production path: bf16 MXU, VMEM-budget-derived tile size, auto shard
    #    count (1 on single-TC v5e/v6e, 2 on multi-TC chips). Looser check.
    lb3 = jax.block_until_ready(fwd_bf16(x2, y2, params, kperm))
    np.testing.assert_allclose(np.asarray(lb3), np.asarray(ref2),
                               rtol=5e-2, atol=5e-2)

    print("KERNEL_OK")
</pallas_src>

<mosaic_0001>
module attributes {stable_mosaic.version = 11 : i64} {
  func.func @_mine_kernel(%arg0: i32, %arg1: i32, %arg2: memref<16x12xf32, #tpu.memory_space<vmem>>, %arg3: memref<12x128xf32, #tpu.memory_space<vmem>>, %arg4: memref<12x128xf32, #tpu.memory_space<vmem>>, %arg5: memref<1x128xf32, #tpu.memory_space<vmem>>, %arg6: memref<128x128xf32, #tpu.memory_space<vmem>>, %arg7: memref<1x128xf32, #tpu.memory_space<vmem>>, %arg8: memref<1x128xf32, #tpu.memory_space<vmem>>, %arg9: memref<1x1x128xf32, #tpu.memory_space<vmem>>, %arg10: memref<1x128xf32, #tpu.memory_space<vmem>>, %arg11: memref<1x1xf32, #tpu.memory_space<vmem>>, %arg12: memref<1x1xf32, #tpu.memory_space<vmem>>) attributes {dimension_semantics = [#tpu.dimension_semantics<parallel>, #tpu.dimension_semantics<arbitrary>], iteration_bounds = array<i64: 1, 1>, scalar_prefetch = 0 : i64, scratch_operands = 3 : i64, tpu.core_type = #tpu.core_type<tc>, window_params = [{transform_indices = @transform_0, window_bounds = array<i64: 16, 12>}, {pipeline_mode = #tpu.pipeline_mode<synchronous>, transform_indices = @transform_1, window_bounds = array<i64: 12, 128>}, {pipeline_mode = #tpu.pipeline_mode<synchronous>, transform_indices = @transform_2, window_bounds = array<i64: 12, 128>}, {pipeline_mode = #tpu.pipeline_mode<synchronous>, transform_indices = @transform_3, window_bounds = array<i64: 1, 128>}, {pipeline_mode = #tpu.pipeline_mode<synchronous>, transform_indices = @transform_4, window_bounds = array<i64: 128, 128>}, {pipeline_mode = #tpu.pipeline_mode<synchronous>, transform_indices = @transform_5, window_bounds = array<i64: 1, 128>}, {pipeline_mode = #tpu.pipeline_mode<synchronous>, transform_indices = @transform_6, window_bounds = array<i64: 1, 128>}, {transform_indices = @transform_7, window_bounds = array<i64: 1, 1, 128>}]} {
    %c1_i32 = arith.constant 1 : i32
    %0 = arith.muli %arg0, %c1_i32 : i32
    %1 = arith.addi %0, %arg1 : i32
    %c16_i32 = arith.constant 16 : i32
    %2 = arith.muli %1, %c16_i32 : i32
    %c0_i32 = arith.constant 0 : i32
    %3 = arith.cmpi eq, %arg1, %c0_i32 : i32
    %4 = arith.extui %3 : i1 to i32
    %c0_i32_0 = arith.constant 0 : i32
    %5 = arith.cmpi ne, %4, %c0_i32_0 : i32
    scf.if %5 {
      %cst = arith.constant 0.000000e+00 : f32
      %12 = vector.broadcast %cst : f32 to vector<1x128xf32>
      %c0 = arith.constant 0 : index
      %c0_5 = arith.constant 0 : index
      %13 = vector.load %arg10[%c0, %c0_5] : memref<1x128xf32, #tpu.memory_space<vmem>>, vector<1x128xf32>
      tpu.vector_store %arg10[%c0, %c0_5], %12 {strides = array<i32>} : memref<1x128xf32, #tpu.memory_space<vmem>>, vector<1x128xf32>,
      %cst_6 = arith.constant 0xFF800000 : f32
      %14 = vector.broadcast %cst_6 : f32 to vector<1x1xf32>
      %c0_7 = arith.constant 0 : index
      %c0_8 = arith.constant 0 : index
      %15 = vector.load %arg11[%c0_7, %c0_8] : memref<1x1xf32, #tpu.memory_space<vmem>>, vector<1x1xf32>
      tpu.vector_store %arg11[%c0_7, %c0_8], %14 {strides = array<i32>} : memref<1x1xf32, #tpu.memory_space<vmem>>, vector<1x1xf32>,
      %cst_9 = arith.constant 0.000000e+00 : f32
      %16 = vector.broadcast %cst_9 : f32 to vector<1x1xf32>
      %c0_10 = arith.constant 0 : index
      %c0_11 = arith.constant 0 : index
      %17 = vector.load %arg12[%c0_10, %c0_11] : memref<1x1xf32, #tpu.memory_space<vmem>>, vector<1x1xf32>
      tpu.vector_store %arg12[%c0_10, %c0_11], %16 {strides = array<i32>} : memref<1x1xf32, #tpu.memory_space<vmem>>, vector<1x1xf32>,
    } else {
    }
    %c16_i32_1 = arith.constant 16 : i32
    %6 = arith.cmpi slt, %2, %c16_i32_1 : i32
    %7 = arith.extui %6 : i1 to i32
    %c0_i32_2 = arith.constant 0 : i32
    %8 = arith.cmpi ne, %7, %c0_i32_2 : i32
    scf.if %8 {
      %c0 = arith.constant 0 : index
      %c0_5 = arith.constant 0 : index
      %12 = vector.load %arg5[%c0, %c0_5] : memref<1x128xf32, #tpu.memory_space<vmem>>, vector<1x128xf32>
      %c0_6 = arith.constant 0 : index
      %c0_7 = arith.constant 0 : index
      %13 = vector.load %arg7[%c0_6, %c0_7] : memref<1x128xf32, #tpu.memory_space<vmem>>, vector<1x128xf32>
      %c0_8 = arith.constant 0 : index
      %c0_9 = arith.constant 0 : index
      %14 = vector.load %arg2[%c0_8, %c0_9] : memref<16x12xf32, #tpu.memory_space<vmem>>, vector<16x12xf32>
      %c0_10 = arith.constant 0 : index
      %c0_11 = arith.constant 0 : index
      %15 = vector.load %arg3[%c0_10, %c0_11] : memref<12x128xf32, #tpu.memory_space<vmem>>, vector<12x128xf32>
      %cst = arith.constant dense<0.000000e+00> : vector<16x128xf32>
      %16 = tpu.matmul %14, %15, %cst {dimension_numbers = #tpu.dot_dimension_numbers<[1], [0], [0], [1], [0, 0, 1, 1], [], []>} : vector<16x12xf32>, vector<12x128xf32>, vector<16x128xf32> -> vector<16x128xf32>
      %17 = vector.broadcast %12 : vector<1x128xf32> to vector<16x128xf32>
      %18 = arith.addf %16, %17 : vector<16x128xf32>
      %cst_12 = arith.constant 0.000000e+00 : f32
      %19 = vector.broadcast %cst_12 : f32 to vector<16x128xf32>
      %20 = arith.maximumf %18, %19 : vector<16x128xf32>
      %c0_13 = arith.constant 0 : index
      %c0_14 = arith.constant 0 : index
      %21 = vector.load %arg4[%c0_13, %c0_14] : memref<12x128xf32, #tpu.memory_space<vmem>>, vector<12x128xf32>
      %cst_15 = arith.constant dense<0.000000e+00> : vector<16x128xf32>
      %22 = tpu.matmul %14, %21, %cst_15 {dimension_numbers = #tpu.dot_dimension_numbers<[1], [0], [0], [1], [0, 0, 1, 1], [], []>} : vector<16x12xf32>, vector<12x128xf32>, vector<16x128xf32> -> vector<16x128xf32>
      %23 = vector.broadcast %12 : vector<1x128xf32> to vector<16x128xf32>
      %24 = arith.addf %22, %23 : vector<16x128xf32>
      %cst_16 = arith.constant 0.000000e+00 : f32
      %25 = vector.broadcast %cst_16 : f32 to vector<16x128xf32>
      %26 = arith.maximumf %24, %25 : vector<16x128xf32>
      %c0_17 = arith.constant 0 : index
      %c0_18 = arith.constant 0 : index
      %27 = vector.load %arg6[%c0_17, %c0_18] : memref<128x128xf32, #tpu.memory_space<vmem>>, vector<128x128xf32>
      %cst_19 = arith.constant dense<0.000000e+00> : vector<16x128xf32>
      %28 = tpu.matmul %20, %27, %cst_19 {dimension_numbers = #tpu.dot_dimension_numbers<[1], [0], [0], [1], [0, 0, 1, 1], [], []>} : vector<16x128xf32>, vector<128x128xf32>, vector<16x128xf32> -> vector<16x128xf32>
      %29 = vector.broadcast %13 : vector<1x128xf32> to vector<16x128xf32>
      %30 = arith.addf %28, %29 : vector<16x128xf32>
      %cst_20 = arith.constant 0.000000e+00 : f32
      %31 = vector.broadcast %cst_20 : f32 to vector<16x128xf32>
      %32 = arith.maximumf %30, %31 : vector<16x128xf32>
      %c0_21 = arith.constant 0 : index
      %c0_22 = arith.constant 0 : index
      %33 = vector.load %arg6[%c0_21, %c0_22] : memref<128x128xf32, #tpu.memory_space<vmem>>, vector<128x128xf32>
      %cst_23 = arith.constant dense<0.000000e+00> : vector<16x128xf32>
      %34 = tpu.matmul %26, %33, %cst_23 {dimension_numbers = #tpu.dot_dimension_numbers<[1], [0], [0], [1], [0, 0, 1, 1], [], []>} : vector<16x128xf32>, vector<128x128xf32>, vector<16x128xf32> -> vector<16x128xf32>
      %35 = vector.broadcast %13 : vector<1x128xf32> to vector<16x128xf32>
      %36 = arith.addf %34, %35 : vector<16x128xf32>
      %cst_24 = arith.constant 0.000000e+00 : f32
      %37 = vector.broadcast %cst_24 : f32 to vector<16x128xf32>
      %38 = arith.maximumf %36, %37 : vector<16x128xf32>
      %c0_25 = arith.constant 0 : index
      %c0_26 = arith.constant 0 : index
      %39 = vector.load %arg8[%c0_25, %c0_26] : memref<1x128xf32, #tpu.memory_space<vmem>>, vector<1x128xf32>
      %40 = vector.broadcast %39 : vector<1x128xf32> to vector<16x128xf32>
      %41 = arith.mulf %38, %40 : vector<16x128xf32>
      %cst_27 = arith.constant dense<0.000000e+00> : vector<16xf32>
      %42 = vector.multi_reduction <add>, %41, %cst_27 [1] : vector<16x128xf32> to vector<16xf32>
      %43 = vector.shape_cast %42 : vector<16xf32> to vector<16x1xf32>
      %c16_i32_28 = arith.constant 16 : i32
      %44 = arith.addi %2, %c16_i32_28 : i32
      %c16_i32_29 = arith.constant 16 : i32
      %45 = arith.cmpi sle, %44, %c16_i32_29 : i32
      %46 = arith.extui %45 : i1 to i32
      %c0_i32_30 = arith.constant 0 : i32
      %47 = arith.cmpi ne, %46, %c0_i32_30 : i32
      scf.if %47 {
        %c0_32 = arith.constant 0 : index
        %c0_33 = arith.constant 0 : index
        %51 = vector.load %arg10[%c0_32, %c0_33] : memref<1x128xf32, #tpu.memory_space<vmem>>, vector<1x128xf32>
        %cst_34 = arith.constant dense<0.000000e+00> : vector<128xf32>
        %52 = vector.multi_reduction <add>, %32, %cst_34 [0] : vector<16x128xf32> to vector<128xf32>
        %53 = vector.shape_cast %52 : vector<128xf32> to vector<1x128xf32>
        %54 = arith.addf %51, %53 : vector<1x128xf32>
        %c0_35 = arith.constant 0 : index
        %c0_36 = arith.constant 0 : index
        %55 = vector.load %arg10[%c0_35, %c0_36] : memref<1x128xf32, #tpu.memory_space<vmem>>, vector<1x128xf32>
        tpu.vector_store %arg10[%c0_35, %c0_36], %54 {strides = array<i32>} : memref<1x128xf32, #tpu.memory_space<vmem>>, vector<1x128xf32>,
        %c0_37 = arith.constant 0 : index
        %c0_38 = arith.constant 0 : index
        %56 = vector.load %arg11[%c0_37, %c0_38] : memref<1x1xf32, #tpu.memory_space<vmem>>, vector<1x1xf32>
        %cst_39 = arith.constant dense<0xFF800000> : vector<1xf32>
        %57 = vector.multi_reduction <maximumf>, %43, %cst_39 [0] : vector<16x1xf32> to vector<1xf32>
        %58 = vector.shape_cast %57 : vector<1xf32> to vector<1x1xf32>
        %59 = arith.maximumf %56, %58 : vector<1x1xf32>
        %cst_40 = arith.constant 0xFF800000 : f32
        %60 = vector.broadcast %cst_40 : f32 to vector<1x1xf32>
        %61 = arith.cmpf oeq, %56, %60 : vector<1x1xf32>
        %62 = arith.subf %56, %59 : vector<1x1xf32>
        %63 = math.exp %62 : vector<1x1xf32>
        %cst_41 = arith.constant 0.000000e+00 : f32
        %64 = vector.broadcast %cst_41 : f32 to vector<1x1xf32>
        %65 = arith.select %61, %64, %63 : vector<1x1xi1>, vector<1x1xf32>
        %66 = vector.broadcast %59 : vector<1x1xf32> to vector<16x1xf32>
        %67 = arith.subf %43, %66 : vector<16x1xf32>
        %68 = math.exp %67 : vector<16x1xf32>
        %cst_42 = arith.constant dense<0.000000e+00> : vector<1xf32>
        %69 = vector.multi_reduction <add>, %68, %cst_42 [0] : vector<16x1xf32> to vector<1xf32>
        %70 = vector.shape_cast %69 : vector<1xf32> to vector<1x1xf32>
        %c0_43 = arith.constant 0 : index
        %c0_44 = arith.constant 0 : index
        %71 = vector.load %arg12[%c0_43, %c0_44] : memref<1x1xf32, #tpu.memory_space<vmem>>, vector<1x1xf32>
        %72 = arith.mulf %71, %65 : vector<1x1xf32>
        %73 = arith.addf %72, %70 : vector<1x1xf32>
        %c0_45 = arith.constant 0 : index
        %c0_46 = arith.constant 0 : index
        %74 = vector.load %arg12[%c0_45, %c0_46] : memref<1x1xf32, #tpu.memory_space<vmem>>, vector<1x1xf32>
        tpu.vector_store %arg12[%c0_45, %c0_46], %73 {strides = array<i32>} : memref<1x1xf32, #tpu.memory_space<vmem>>, vector<1x1xf32>,
        %c0_47 = arith.constant 0 : index
        %c0_48 = arith.constant 0 : index
        %75 = vector.load %arg11[%c0_47, %c0_48] : memref<1x1xf32, #tpu.memory_space<vmem>>, vector<1x1xf32>
        tpu.vector_store %arg11[%c0_47, %c0_48], %59 {strides = array<i32>} : memref<1x1xf32, #tpu.memory_space<vmem>>, vector<1x1xf32>,
      } else {
      }
      %true = arith.constant true
      %48 = arith.xori %45, %true : i1
      %49 = arith.extui %48 : i1 to i32
      %c0_i32_31 = arith.constant 0 : i32
      %50 = arith.cmpi ne, %49, %c0_i32_31 : i32
      scf.if %50 {
        %51 = tpu.iota {dimensions = array<i32: 0>} : vector<16x1xi32>
        %52 = vector.broadcast %2 : i32 to vector<16x1xi32>
        %53 = arith.addi %52, %51 : vector<16x1xi32>
        %c16_i32_32 = arith.constant 16 : i32
        %54 = vector.broadcast %c16_i32_32 : i32 to vector<16x1xi32>
        %55 = arith.cmpi slt, %53, %54 : vector<16x1xi32>
        %c0_33 = arith.constant 0 : index
        %c0_34 = arith.constant 0 : index
        %56 = vector.load %arg10[%c0_33, %c0_34] : memref<1x128xf32, #tpu.memory_space<vmem>>, vector<1x128xf32>
        %cst_35 = arith.constant 0.000000e+00 : f32
        %57 = vector.shape_cast %55 : vector<16x1xi1> to vector<16x1xi1>
        %58 = vector.broadcast %57 : vector<16x1xi1> to vector<16x128xi1>
        %59 = vector.broadcast %cst_35 : f32 to vector<16x128xf32>
        %60 = arith.select %58, %32, %59 : vector<16x128xi1>, vector<16x128xf32>
        %cst_36 = arith.constant dense<0.000000e+00> : vector<128xf32>
        %61 = vector.multi_reduction <add>, %60, %cst_36 [0] : vector<16x128xf32> to vector<128xf32>
        %62 = vector.shape_cast %61 : vector<128xf32> to vector<1x128xf32>
        %63 = arith.addf %56, %62 : vector<1x128xf32>
        %c0_37 = arith.constant 0 : index
        %c0_38 = arith.constant 0 : index
        %64 = vector.load %arg10[%c0_37, %c0_38] : memref<1x128xf32, #tpu.memory_space<vmem>>, vector<1x128xf32>
        tpu.vector_store %arg10[%c0_37, %c0_38], %63 {strides = array<i32>} : memref<1x128xf32, #tpu.memory_space<vmem>>, vector<1x128xf32>,
        %cst_39 = arith.constant 0xFF800000 : f32
        %65 = vector.broadcast %cst_39 : f32 to vector<16x1xf32>
        %66 = arith.select %55, %43, %65 : vector<16x1xi1>, vector<16x1xf32>
        %c0_40 = arith.constant 0 : index
        %c0_41 = arith.constant 0 : index
        %67 = vector.load %arg11[%c0_40, %c0_41] : memref<1x1xf32, #tpu.memory_space<vmem>>, vector<1x1xf32>
        %cst_42 = arith.constant dense<0xFF800000> : vector<1xf32>
        %68 = vector.multi_reduction <maximumf>, %66, %cst_42 [0] : vector<16x1xf32> to vector<1xf32>
        %69 = vector.shape_cast %68 : vector<1xf32> to vector<1x1xf32>
        %70 = arith.maximumf %67, %69 : vector<1x1xf32>
        %cst_43 = arith.constant 0xFF800000 : f32
        %71 = vector.broadcast %cst_43 : f32 to vector<1x1xf32>
        %72 = arith.cmpf oeq, %67, %71 : vector<1x1xf32>
        %73 = arith.subf %67, %70 : vector<1x1xf32>
        %74 = math.exp %73 : vector<1x1xf32>
        %cst_44 = arith.constant 0.000000e+00 : f32
        %75 = vector.broadcast %cst_44 : f32 to vector<1x1xf32>
        %76 = arith.select %72, %75, %74 : vector<1x1xi1>, vector<1x1xf32>
        %77 = vector.broadcast %70 : vector<1x1xf32> to vector<16x1xf32>
        %78 = arith.subf %66, %77 : vector<16x1xf32>
        %79 = math.exp %78 : vector<16x1xf32>
        %cst_45 = arith.constant dense<0.000000e+00> : vector<1xf32>
        %80 = vector.multi_reduction <add>, %79, %cst_45 [0] : vector<16x1xf32> to vector<1xf32>
        %81 = vector.shape_cast %80 : vector<1xf32> to vector<1x1xf32>
        %c0_46 = arith.constant 0 : index
        %c0_47 = arith.constant 0 : index
        %82 = vector.load %arg12[%c0_46, %c0_47] : memref<1x1xf32, #tpu.memory_space<vmem>>, vector<1x1xf32>
        %83 = arith.mulf %82, %76 : vector<1x1xf32>
        %84 = arith.addf %83, %81 : vector<1x1xf32>
        %c0_48 = arith.constant 0 : index
        %c0_49 = arith.constant 0 : index
        %85 = vector.load %arg12[%c0_48, %c0_49] : memref<1x1xf32, #tpu.memory_space<vmem>>, vector<1x1xf32>
        tpu.vector_store %arg12[%c0_48, %c0_49], %84 {strides = array<i32>} : memref<1x1xf32, #tpu.memory_space<vmem>>, vector<1x1xf32>,
        %c0_50 = arith.constant 0 : index
        %c0_51 = arith.constant 0 : index
        %86 = vector.load %arg11[%c0_50, %c0_51] : memref<1x1xf32, #tpu.memory_space<vmem>>, vector<1x1xf32>
        tpu.vector_store %arg11[%c0_50, %c0_51], %70 {strides = array<i32>} : memref<1x1xf32, #tpu.memory_space<vmem>>, vector<1x1xf32>,
      } else {
      }
    } else {
    }
    %c0_i32_3 = arith.constant 0 : i32
    %9 = arith.cmpi eq, %arg1, %c0_i32_3 : i32
    %10 = arith.extui %9 : i1 to i32
    %c0_i32_4 = arith.constant 0 : i32
    %11 = arith.cmpi ne, %10, %c0_i32_4 : i32
    scf.if %11 {
      %c0 = arith.constant 0 : index
      %c0_5 = arith.constant 0 : index
      %12 = vector.load %arg10[%c0, %c0_5] : memref<1x128xf32, #tpu.memory_space<vmem>>, vector<1x128xf32>
      %c0_6 = arith.constant 0 : index
      %c0_7 = arith.constant 0 : index
      %13 = vector.load %arg8[%c0_6, %c0_7] : memref<1x128xf32, #tpu.memory_space<vmem>>, vector<1x128xf32>
      %14 = arith.mulf %12, %13 : vector<1x128xf32>
      %cst = arith.constant dense<0.000000e+00> : vector<1xf32>
      %15 = vector.multi_reduction <add>, %14, %cst [1] : vector<1x128xf32> to vector<1xf32>
      %16 = vector.shape_cast %15 : vector<1xf32> to vector<1x1xf32>
      %17 = tpu.iota {dimensions = array<i32: 1>} : vector<1x128xi32>
      %c0_i32_8 = arith.constant 0 : i32
      %18 = vector.broadcast %c0_i32_8 : i32 to vector<1x128xi32>
      %19 = arith.cmpi eq, %17, %18 : vector<1x128xi32>
      %c1_i32_9 = arith.constant 1 : i32
      %20 = vector.broadcast %c1_i32_9 : i32 to vector<1x128xi32>
      %21 = arith.cmpi eq, %17, %20 : vector<1x128xi32>
      %c0_10 = arith.constant 0 : index
      %c0_11 = arith.constant 0 : index
      %22 = vector.load %arg11[%c0_10, %c0_11] : memref<1x1xf32, #tpu.memory_space<vmem>>, vector<1x1xf32>
      %c2_i32 = arith.constant 2 : i32
      %23 = vector.broadcast %c2_i32 : i32 to vector<1x128xi32>
      %24 = arith.cmpi eq, %17, %23 : vector<1x128xi32>
      %c0_12 = arith.constant 0 : index
      %c0_13 = arith.constant 0 : index
      %25 = vector.load %arg12[%c0_12, %c0_13] : memref<1x1xf32, #tpu.memory_space<vmem>>, vector<1x1xf32>
      %cst_14 = arith.constant 0.000000e+00 : f32
      %26 = vector.shape_cast %25 : vector<1x1xf32> to vector<1x1xf32>
      %27 = vector.broadcast %26 : vector<1x1xf32> to vector<1x128xf32>
      %28 = vector.broadcast %cst_14 : f32 to vector<1x128xf32>
      %29 = arith.select %24, %27, %28 : vector<1x128xi1>, vector<1x128xf32>
      %30 = vector.shape_cast %22 : vector<1x1xf32> to vector<1x1xf32>
      %31 = vector.broadcast %30 : vector<1x1xf32> to vector<1x128xf32>
      %32 = arith.select %21, %31, %29 : vector<1x128xi1>, vector<1x128xf32>
      %33 = vector.shape_cast %16 : vector<1x1xf32> to vector<1x1xf32>
      %34 = vector.broadcast %33 : vector<1x1xf32> to vector<1x128xf32>
      %35 = arith.select %19, %34, %32 : vector<1x128xi1>, vector<1x128xf32>
      %36 = vector.shape_cast %35 : vector<1x128xf32> to vector<1x1x128xf32>
      %c0_15 = arith.constant 0 : index
      %c0_16 = arith.constant 0 : index
      %c0_17 = arith.constant 0 : index
      %37 = vector.load %arg9[%c0_15, %c0_16, %c0_17] : memref<1x1x128xf32, #tpu.memory_space<vmem>>, vector<1x1x128xf32>
      tpu.vector_store %arg9[%c0_15, %c0_16, %c0_17], %36 {strides = array<i32>} : memref<1x1x128xf32, #tpu.memory_space<vmem>>, vector<1x1x128xf32>,
    } else {
    }
    return
  }
  func.func @transform_0(%arg0: i32, %arg1: i32) -> (i32, i32) {
    %c1_i32 = arith.constant 1 : i32
    %0 = arith.muli %arg0, %c1_i32 : i32
    %1 = arith.addi %0, %arg1 : i32
    %c0_i32 = arith.constant 0 : i32
    %2 = arith.minsi %1, %c0_i32 : i32
    %c0_i32_0 = arith.constant 0 : i32
    %c0_i32_1 = arith.constant 0 : i32
    return %2, %c0_i32_0 : i32, i32
  }
  func.func @transform_1(%arg0: i32, %arg1: i32) -> (i32, i32) {
    %c0_i32 = arith.constant 0 : i32
    %c0_i32_0 = arith.constant 0 : i32
    %c0_i32_1 = arith.constant 0 : i32
    return %c0_i32, %c0_i32_0 : i32, i32
  }
  func.func @transform_2(%arg0: i32, %arg1: i32) -> (i32, i32) {
    %c0_i32 = arith.constant 0 : i32
    %c0_i32_0 = arith.constant 0 : i32
    %c0_i32_1 = arith.constant 0 : i32
    return %c0_i32, %c0_i32_0 : i32, i32
  }
  func.func @transform_3(%arg0: i32, %arg1: i32) -> (i32, i32) {
    %c0_i32 = arith.constant 0 : i32
    %c0_i32_0 = arith.constant 0 : i32
    %c0_i32_1 = arith.constant 0 : i32
    return %c0_i32, %c0_i32_0 : i32, i32
  }
  func.func @transform_4(%arg0: i32, %arg1: i32) -> (i32, i32) {
    %c0_i32 = arith.constant 0 : i32
    %c0_i32_0 = arith.constant 0 : i32
    %c0_i32_1 = arith.constant 0 : i32
    return %c0_i32, %c0_i32_0 : i32, i32
  }
  func.func @transform_5(%arg0: i32, %arg1: i32) -> (i32, i32) {
    %c0_i32 = arith.constant 0 : i32
    %c0_i32_0 = arith.constant 0 : i32
    %c0_i32_1 = arith.constant 0 : i32
    return %c0_i32, %c0_i32_0 : i32, i32
  }
  func.func @transform_6(%arg0: i32, %arg1: i32) -> (i32, i32) {
    %c0_i32 = arith.constant 0 : i32
    %c0_i32_0 = arith.constant 0 : i32
    %c0_i32_1 = arith.constant 0 : i32
    return %c0_i32, %c0_i32_0 : i32, i32
  }
  func.func @transform_7(%arg0: i32, %arg1: i32) -> (i32, i32, i32) {
    %c0_i32 = arith.constant 0 : i32
    %c0_i32_0 = arith.constant 0 : i32
    %c0_i32_1 = arith.constant 0 : i32
    return %arg0, %c0_i32, %c0_i32_0 : i32, i32, i32
  }
}

</mosaic_0001>

<llo_original>
// kernel: mine_forward.1
$region0: #{mine_forward.1}
  #allocation0 [shape = 'u32[]', space=smem, size = 0x4, offset = 0x4, fixed_abs, tag = 'smem constant byte address 0x4 - core index']
  #allocation1 [shape = 'u32[144,128]{1,0:T(1,128)}', space=vmem, size = 0x12000, scoped, tag = 'internal scratch']
  #allocation2 [shape = 'f32[1,128]{1,0:T(1,128)}', space=vmem, size = 0x200, scoped, tag = 'scratch operand']
  #allocation3 [shape = 'f32[1,1]{1,0:T(1,128)}', space=vmem, size = 0x200, scoped, tag = 'scratch operand']
  #allocation4 [shape = 'f32[1,1]{1,0:T(1,128)}', space=vmem, size = 0x200, scoped, tag = 'scratch operand']
  %s0 = inlined_call_operand.vmem [shape: f32[16,12], index: 0, kind: input, shape index: {}]
  %s1 = inlined_call_operand.vmem [shape: f32[12,128], index: 1, kind: input, shape index: {}]
  %s2 = inlined_call_operand.vmem [shape: f32[12,128], index: 2, kind: input, shape index: {}]
  %s3 = inlined_call_operand.vmem [shape: f32[1,128], index: 3, kind: input, shape index: {}]
  %s4 = inlined_call_operand.vmem [shape: f32[128,128], index: 4, kind: input, shape index: {}]
  %s5 = inlined_call_operand.vmem [shape: f32[1,128], index: 5, kind: input, shape index: {}]
  %s6 = inlined_call_operand.vmem [shape: f32[1,128], index: 6, kind: input, shape index: {}]
  %s7 = inlined_call_operand.vmem [shape: f32[1,1,128], index: 7, kind: output, shape index: {}]
  %s8 = sld [smem:[#allocation0]]
  $region58: #{mine_forward.1} parent=0
    _
  %s10 = ssub.s32 1, %s8
  %s11 = scalar_select 0, %s10, %s8
  // Predicated region
  $region2: #{mine_forward.1} parent=0 // pred_check
    _
  $region3: #{mine_forward.1} parent=0 // pred_check_branch
    %13 = sbr.rel (0) target = $region5
  $region4: #{mine_forward.1} parent=0 // pred_region
    %s14 = sadd.s32 0, 0
    %p15 = scmp.lt.s32.totalorder %s14, 0
    %s16 = scalar_select %p15, %s14, 0
    %s17 = smul.u32 2, %s16
    %p18 = scmp.lt.s32.totalorder %s17, 1
    %s19 = scalar_select %p18, %s17, 1
    %s20 = smul.addr %s19, 8
    %s21 = scalar_lea.vmem %s0, %s20
    %s22 = sadd.s32 0, 0
    %p23 = scmp.lt.s32.totalorder %s22, 0
    %s24 = scalar_select %p23, %s22, 0
    %s25 = smul.u32 2, %s24
  $region5: #{mine_forward.1} parent=0 // pred_fallthru
    _
  // Predicated region
  $region6: #{mine_forward.1} parent=0 // pred_check
    _
  $region7: #{mine_forward.1} parent=0 // pred_check_branch
    %27 = sbr.rel (0) target = $region9
  $region8: #{mine_forward.1} parent=0 // pred_region
    _
  $region9: #{mine_forward.1} parent=0 // pred_fallthru
    _
  // Predicated region
  $region10: #{mine_forward.1} parent=0 // pred_check
    _
  $region11: #{mine_forward.1} parent=0 // pred_check_branch
    %29 = sbr.rel (0) target = $region13
  $region12: #{mine_forward.1} parent=0 // pred_region
    _
  $region13: #{mine_forward.1} parent=0 // pred_fallthru
    _
  // Predicated region
  $region14: #{mine_forward.1} parent=0 // pred_check
    _
  $region15: #{mine_forward.1} parent=0 // pred_check_branch
    %31 = sbr.rel (0) target = $region17
  $region16: #{mine_forward.1} parent=0 // pred_region
    _
  $region17: #{mine_forward.1} parent=0 // pred_fallthru
    _
  // Predicated region
  $region18: #{mine_forward.1} parent=0 // pred_check
    _
  $region19: #{mine_forward.1} parent=0 // pred_check_branch
    %33 = sbr.rel (0) target = $region21
  $region20: #{mine_forward.1} parent=0 // pred_region
    _
  $region21: #{mine_forward.1} parent=0 // pred_fallthru
    _
  // Predicated region
  $region22: #{mine_forward.1} parent=0 // pred_check
    _
  $region23: #{mine_forward.1} parent=0 // pred_check_branch
    %35 = sbr.rel (0) target = $region25
  $region24: #{mine_forward.1} parent=0 // pred_region
    _
  $region25: #{mine_forward.1} parent=0 // pred_fallthru
    _
  // Predicated region
  $region26: #{mine_forward.1} parent=0 // pred_check
    _
  $region27: #{mine_forward.1} parent=0 // pred_check_branch
    %37 = sbr.rel (0) target = $region29
  $region28: #{mine_forward.1} parent=0 // pred_region
    _
  $region29: #{mine_forward.1} parent=0 // pred_fallthru
    _
  %s38 = sadd.s32 0, 0
  %p39 = scmp.lt.s32.totalorder %s38, 0
  %s40 = scalar_select %p39, %s38, 0
  %s41 = smul.u32 2, %s40
  %p42 = scmp.lt.s32.totalorder %s41, 1
  %s43 = scalar_select %p42, %s41, 1
  %s44 = smul.addr %s43, 8
  %s45 = scalar_lea.vmem %s0, %s44
  %s46 = sadd.s32 0, 0
  %p47 = scmp.lt.s32.totalorder %s46, 0
  %s48 = scalar_select %p47, %s46, 0
  %s49 = smul.u32 2, %s48
  %p50 = scmp.lt.s32.totalorder %s49, 1
  %s51 = scalar_select %p50, %s49, 1
  %s52 = smul.addr %s51, 8
  %s53 = scalar_lea.vmem %s0, %s52
  %s54 = sadd.s32 0, 0
  %p55 = scmp.lt.s32.totalorder %s54, 0
  %s56 = scalar_select %p55, %s54, 0
  %s57 = smul.u32 2, %s56
  %s58 = sadd.s32 0, 0
  %s59 = smul.u32 %s58, 16
  %p60 = scmp.eq.s32.totalorder 0, 0
  // Predicated region
  $region30: #{mine_forward.1} parent=0 // pred_check
    %p61 = pneg %p60
  $region31: #{mine_forward.1} parent=0 // pred_check_branch
    %63 = sbr.rel (%p61) target = $region33
  $region32: #{mine_forward.1} parent=0 // pred_region
    %64 = vst [vmem:[#allocation2] sm:$0x1] 0.0
    %vm65 = vcmask 0
    %66 = vst.msk [vmem:[#allocation3] sm:$0x1] %vm65, -inf
    %67 = vst.msk [vmem:[#allocation4] sm:$0x1] %vm65, 0.0
  $region33: #{mine_forward.1} parent=0 // pred_fallthru
    _
  %p68 = scmp.lt.s32.totalorder %s59, 16
  // Predicated region
  $region34: #{mine_forward.1} parent=0 // pred_check
    %p69 = pneg %p68
  $region35: #{mine_forward.1} parent=0 // pred_check_branch
    %71 = sbr.rel (%p69) target = $region37
  $region36: #{mine_forward.1} parent=0 // pred_region
    %v72 = vld [vmem:[%s3] sm:$0x1]
    %v73 = vld [vmem:[%s5] sm:$0x1]
    %v74 = vld [vmem:[%s53] sm:$0xff]
    %v75 = vld [vmem:[%s53 + $0x8] sm:$0xff]
    %v76 = vld [vmem:[%s1] sm:$0xff]
    %v77 = vld [vmem:[%s1 + $0x8] sm:$0xf]
    %v79 = vlaneseq
    %v80 = vshrl.u32 %v79, 7
    %v81 = vsub.s32 0, %v80
    %v82 = vrot.slane %v72, %v81
    %vm84 = vcmask 97280
    %v86 = vsel %vm84, %v74, 0
    %v89 = vsel %vm84, %v75, 0
    %vm91 = vcmask 1043456
    %v93 = vsel %vm91, %v77, 0
    %95 = vmatprep.subr.mxu0 0.0
    %96 = vmatpush1.msra.mxu0 %v76
    %97 = vmatprep.subr.mxu0 0.0
    %98 = vmatpush1.msra.mxu0 %v93
    %99 = vmatprep.subr.mxu0 0.0
    %100 = vmatpush1.msra.mxu0 0.0
    %101 = vmatprep.subr.mxu0 0.0
    %102 = vmatpush1.msra.mxu0 0.0
    %103 = vmatprep.subr.mxu0 0.0
    %104 = vmatpush1.msra.mxu0 0.0
    %105 = vmatprep.subr.mxu0 0.0
    %106 = vmatpush1.msra.mxu0 0.0
    %107 = vmatprep.subr.mxu0 0.0
    %108 = vmatpush1.msra.mxu0 0.0
    %109 = vmatprep.subr.mxu0 0.0
    %110 = vmatpush1.msra.mxu0 0.0
    %111 = vmatprep.subr.mxu0 0.0
    %112 = vmatpush1.msra.mxu0 0.0
    %113 = vmatprep.subr.mxu0 0.0
    %114 = vmatpush1.msra.mxu0 0.0
    %115 = vmatprep.subr.mxu0 0.0
    %116 = vmatpush1.msra.mxu0 0.0
    %117 = vmatprep.subr.mxu0 0.0
    %118 = vmatpush1.msra.mxu0 0.0
    %119 = vmatprep.subr.mxu0 0.0
    %120 = vmatpush1.msra.mxu0 0.0
    %121 = vmatprep.subr.mxu0 0.0
    %122 = vmatpush1.msra.mxu0 0.0
    %123 = vmatprep.subr.mxu0 0.0
    %124 = vmatpush1.msra.mxu0 0.0
    %125 = vmatprep.subr.mxu0 0.0
    %126 = vmatpush1.msra.mxu0 0.0
    %127 = vmatprep.subr.mxu0 0.0
    %128 = vmatpush1.msra.mxu0 0.0
    %129 = vmatprep.subr.mxu0 0.0
    %130 = vmatpush1.msra.mxu0 0.0
    %131 = vmatprep.subr.mxu0 0.0
    %132 = vmatpush1.msra.mxu0 0.0
    %133 = vmatprep.subr.mxu0 0.0
    %134 = vmatpush1.msra.mxu0 0.0
    %135 = vmatprep.subr.mxu0 0.0
    %136 = vmatpush1.msra.mxu0 0.0
    %137 = vmatprep.subr.mxu0 0.0
    %138 = vmatpush1.msra.mxu0 0.0
    %139 = vmatprep.subr.mxu0 0.0
    %140 = vmatpush1.msra.mxu0 0.0
    %141 = vmatprep.subr.mxu0 0.0
    %142 = vmatpush1.msra.mxu0 0.0
    %143 = vmatprep.subr.mxu0 0.0
    %144 = vmatpush1.msra.mxu0 0.0
    %145 = vmatprep.subr.mxu0 0.0
    %146 = vmatpush1.msra.mxu0 0.0
    %147 = vmatprep.subr.mxu0 0.0
    %148 = vmatpush1.msra.mxu0 0.0
    %149 = vmatprep.subr.mxu0 0.0
    %150 = vmatpush1.msra.mxu0 0.0
    %151 = vmatprep.subr.mxu0 0.0
    %152 = vmatpush1.msra.mxu0 0.0
    %153 = vmatprep.subr.mxu0 0.0
    %154 = vmatpush1.msra.mxu0 0.0
    %155 = vmatprep.subr.mxu0 0.0
    %156 = vmatpush1.msra.mxu0 0.0
    %157 = vmatprep.subr.mxu0 0.0
    %158 = vmatpush1.msra.mxu0 0.0
    %159 = vmatprep.mubr.f32.mxu0 0.0
    %160 = vmatmul.mubr.f32.gmra.mrb[0].mxu0 %v86
    %v161 = vpop.f32.mrb[0].mxu0
    %v162 = vadd.f32 %v82, %v161
    %v163 = vpop.f32.mrb[0].mxu0
    %164 = vmatprep.mubr.f32.mxu0 0.0
    %165 = vmatmul.mubr.f32.gmra.mrb[0].mxu0 %v89
    %v166 = vpop.f32.mrb[0].mxu0
    %v167 = vadd.f32 %v82, %v166
    %v168 = vpop.f32.mrb[0].mxu0
    %169 = vdwg.mxu0
    %v170 = vmax.f32 %v162, 0.0
    %v171 = vmax.f32 %v167, 0.0
    %v172 = vld [vmem:[%s2] sm:$0xff]
    %v173 = vld [vmem:[%s2 + $0x8] sm:$0xf]
    %v175 = vsel %vm91, %v173, 0
    %177 = vmatprep.subr.mxu0 0.0
    %178 = vmatpush1.msra.mxu0 %v172
    %179 = vmatprep.subr.mxu0 0.0
    %180 = vmatpush1.msra.mxu0 %v175
    %181 = vmatprep.subr.mxu0 0.0
    %182 = vmatpush1.msra.mxu0 0.0
    %183 = vmatprep.subr.mxu0 0.0
    %184 = vmatpush1.msra.mxu0 0.0
    %185 = vmatprep.subr.mxu0 0.0
    %186 = vmatpush1.msra.mxu0 0.0
    %187 = vmatprep.subr.mxu0 0.0
    %188 = vmatpush1.msra.mxu0 0.0
    %189 = vmatprep.subr.mxu0 0.0
    %190 = vmatpush1.msra.mxu0 0.0
    %191 = vmatprep.subr.mxu0 0.0
    %192 = vmatpush1.msra.mxu0 0.0
    %193 = vmatprep.subr.mxu0 0.0
    %194 = vmatpush1.msra.mxu0 0.0
    %195 = vmatprep.subr.mxu0 0.0
    %196 = vmatpush1.msra.mxu0 0.0
    %197 = vmatprep.subr.mxu0 0.0
    %198 = vmatpush1.msra.mxu0 0.0
    %199 = vmatprep.subr.mxu0 0.0
    %200 = vmatpush1.msra.mxu0 0.0
    %201 = vmatprep.subr.mxu0 0.0
    %202 = vmatpush1.msra.mxu0 0.0
    %203 = vmatprep.subr.mxu0 0.0
    %204 = vmatpush1.msra.mxu0 0.0
    %205 = vmatprep.subr.mxu0 0.0
    %206 = vmatpush1.msra.mxu0 0.0
    %207 = vmatprep.subr.mxu0 0.0
    %208 = vmatpush1.msra.mxu0 0.0
    %209 = vmatprep.subr.mxu0 0.0
    %210 = vmatpush1.msra.mxu0 0.0
    %211 = vmatprep.subr.mxu0 0.0
    %212 = vmatpush1.msra.mxu0 0.0
    %213 = vmatprep.subr.mxu0 0.0
    %214 = vmatpush1.msra.mxu0 0.0
    %215 = vmatprep.subr.mxu0 0.0
    %216 = vmatpush1.msra.mxu0 0.0
    %217 = vmatprep.subr.mxu0 0.0
    %218 = vmatpush1.msra.mxu0 0.0
    %219 = vmatprep.subr.mxu0 0.0
    %220 = vmatpush1.msra.mxu0 0.0
    %221 = vmatprep.subr.mxu0 0.0
    %222 = vmatpush1.msra.mxu0 0.0
    %223 = vmatprep.subr.mxu0 0.0
    %224 = vmatpush1.msra.mxu0 0.0
    %225 = vmatprep.subr.mxu0 0.0
    %226 = vmatpush1.msra.mxu0 0.0
    %227 = vmatprep.subr.mxu0 0.0
    %228 = vmatpush1.msra.mxu0 0.0
    %229 = vmatprep.subr.mxu0 0.0
    %230 = vmatpush1.msra.mxu0 0.0
    %231 = vmatprep.subr.mxu0 0.0
    %232 = vmatpush1.msra.mxu0 0.0
    %233 = vmatprep.subr.mxu0 0.0
    %234 = vmatpush1.msra.mxu0 0.0
    %235 = vmatprep.subr.mxu0 0.0
    %236 = vmatpush1.msra.mxu0 0.0
    %237 = vmatprep.subr.mxu0 0.0
    %238 = vmatpush1.msra.mxu0 0.0
    %239 = vmatprep.subr.mxu0 0.0
    %240 = vmatpush1.msra.mxu0 0.0
    %241 = vmatprep.mubr.f32.mxu0 0.0
    %242 = vmatmul.mubr.f32.gmra.mrb[0].mxu0 %v86
    %v243 = vpop.f32.mrb[0].mxu0
    %v244 = vadd.f32 %v82, %v243
    %v245 = vpop.f32.mrb[0].mxu0
    %246 = vmatprep.mubr.f32.mxu0 0.0
    %247 = vmatmul.mubr.f32.gmra.mrb[0].mxu0 %v89
    %v248 = vpop.f32.mrb[0].mxu0
    %v249 = vadd.f32 %v82, %v248
    %v250 = vpop.f32.mrb[0].mxu0
    %251 = vdwg.mxu0
    %v252 = vmax.f32 %v244, 0.0
    %v253 = vmax.f32 %v249, 0.0
    %v254 = vld [vmem:[%s4] sm:$0xff]
    %v255 = vld [vmem:[%s4 + $0x8] sm:$0xff]
    %v256 = vld [vmem:[%s4 + $0x10] sm:$0xff]
    %v257 = vld [vmem:[%s4 + $0x18] sm:$0xff]
    %v258 = vld [vmem:[%s4 + $0x20] sm:$0xff]
    %v259 = vld [vmem:[%s4 + $0x28] sm:$0xff]
    %v260 = vld [vmem:[%s4 + $0x30] sm:$0xff]
    %v261 = vld [vmem:[%s4 + $0x38] sm:$0xff]
    %v262 = vld [vmem:[%s4 + $0x40] sm:$0xff]
    %v263 = vld [vmem:[%s4 + $0x48] sm:$0xff]
    %v264 = vld [vmem:[%s4 + $0x50] sm:$0xff]
    %v265 = vld [vmem:[%s4 + $0x58] sm:$0xff]
    %v266 = vld [vmem:[%s4 + $0x60] sm:$0xff]
    %v267 = vld [vmem:[%s4 + $0x68] sm:$0xff]
    %v268 = vld [vmem:[%s4 + $0x70] sm:$0xff]
    %v269 = vld [vmem:[%s4 + $0x78] sm:$0xff]
    %v271 = vlaneseq
    %v272 = vshrl.u32 %v271, 7
    %v273 = vsub.s32 0, %v272
    %v274 = vrot.slane %v73, %v273
    %276 = vmatprep.subr.mxu0 0.0
    %277 = vmatpush1.msra.mxu0 %v254
    %278 = vmatprep.subr.mxu0 0.0
    %279 = vmatpush1.msra.mxu0 %v255
    %280 = vmatprep.subr.mxu0 0.0
    %281 = vmatpush1.msra.mxu0 %v256
    %282 = vmatprep.subr.mxu0 0.0
    %283 = vmatpush1.msra.mxu0 %v257
    %284 = vmatprep.subr.mxu0 0.0
    %285 = vmatpush1.msra.mxu0 %v258
    %286 = vmatprep.subr.mxu0 0.0
    %287 = vmatpush1.msra.mxu0 %v259
    %288 = vmatprep.subr.mxu0 0.0
    %289 = vmatpush1.msra.mxu0 %v260
    %290 = vmatprep.subr.mxu0 0.0
    %291 = vmatpush1.msra.mxu0 %v261
    %292 = vmatprep.subr.mxu0 0.0
    %293 = vmatpush1.msra.mxu0 %v262
    %294 = vmatprep.subr.mxu0 0.0
    %295 = vmatpush1.msra.mxu0 %v263
    %296 = vmatprep.subr.mxu0 0.0
    %297 = vmatpush1.msra.mxu0 %v264
    %298 = vmatprep.subr.mxu0 0.0
    %299 = vmatpush1.msra.mxu0 %v265
    %300 = vmatprep.subr.mxu0 0.0
    %301 = vmatpush1.msra.mxu0 %v266
    %302 = vmatprep.subr.mxu0 0.0
    %303 = vmatpush1.msra.mxu0 %v267
    %304 = vmatprep.subr.mxu0 0.0
    %305 = vmatpush1.msra.mxu0 %v268
    %306 = vmatprep.subr.mxu0 0.0
    %307 = vmatpush1.msra.mxu0 %v269
    %308 = vmatprep.subr.mxu0 0.0
    %309 = vmatpush1.msra.mxu0 0.0
    %310 = vmatprep.subr.mxu0 0.0
    %311 = vmatpush1.msra.mxu0 0.0
    %312 = vmatprep.subr.mxu0 0.0
    %313 = vmatpush1.msra.mxu0 0.0
    %314 = vmatprep.subr.mxu0 0.0
    %315 = vmatpush1.msra.mxu0 0.0
    %316 = vmatprep.subr.mxu0 0.0
    %317 = vmatpush1.msra.mxu0 0.0
    %318 = vmatprep.subr.mxu0 0.0
    %319 = vmatpush1.msra.mxu0 0.0
    %320 = vmatprep.subr.mxu0 0.0
    %321 = vmatpush1.msra.mxu0 0.0
    %322 = vmatprep.subr.mxu0 0.0
    %323 = vmatpush1.msra.mxu0 0.0
    %324 = vmatprep.subr.mxu0 0.0
    %325 = vmatpush1.msra.mxu0 0.0
    %326 = vmatprep.subr.mxu0 0.0
    %327 = vmatpush1.msra.mxu0 0.0
    %328 = vmatprep.subr.mxu0 0.0
    %329 = vmatpush1.msra.mxu0 0.0
    %330 = vmatprep.subr.mxu0 0.0
    %331 = vmatpush1.msra.mxu0 0.0
    %332 = vmatprep.subr.mxu0 0.0
    %333 = vmatpush1.msra.mxu0 0.0
    %334 = vmatprep.subr.mxu0 0.0
    %335 = vmatpush1.msra.mxu0 0.0
    %336 = vmatprep.subr.mxu0 0.0
    %337 = vmatpush1.msra.mxu0 0.0
    %338 = vmatprep.subr.mxu0 0.0
    %339 = vmatpush1.msra.mxu0 0.0
    %340 = vmatprep.mubr.f32.mxu0 0.0
    %341 = vmatmul.mubr.f32.gmra.mrb[0].mxu0 %v170
    %v342 = vpop.f32.mrb[0].mxu0
    %v343 = vadd.f32 %v274, %v342
    %v344 = vpop.f32.mrb[0].mxu0
    %345 = vmatprep.mubr.f32.mxu0 0.0
    %346 = vmatmul.mubr.f32.gmra.mrb[0].mxu0 %v171
    %v347 = vpop.f32.mrb[0].mxu0
    %v348 = vadd.f32 %v274, %v347
    %v349 = vpop.f32.mrb[0].mxu0
    %350 = vdwg.mxu0
    %v351 = vmax.f32 %v343, 0.0
    %v352 = vmax.f32 %v348, 0.0
    %353 = vmatprep.subr.mxu0 0.0
    %354 = vmatpush1.msra.mxu0 %v254
    %355 = vmatprep.subr.mxu0 0.0
    %356 = vmatpush1.msra.mxu0 %v255
    %357 = vmatprep.subr.mxu0 0.0
    %358 = vmatpush1.msra.mxu0 %v256
    %359 = vmatprep.subr.mxu0 0.0
    %360 = vmatpush1.msra.mxu0 %v257
    %361 = vmatprep.subr.mxu0 0.0
    %362 = vmatpush1.msra.mxu0 %v258
    %363 = vmatprep.subr.mxu0 0.0
    %364 = vmatpush1.msra.mxu0 %v259
    %365 = vmatprep.subr.mxu0 0.0
    %366 = vmatpush1.msra.mxu0 %v260
    %367 = vmatprep.subr.mxu0 0.0
    %368 = vmatpush1.msra.mxu0 %v261
    %369 = vmatprep.subr.mxu0 0.0
    %370 = vmatpush1.msra.mxu0 %v262
    %371 = vmatprep.subr.mxu0 0.0
    %372 = vmatpush1.msra.mxu0 %v263
    %373 = vmatprep.subr.mxu0 0.0
    %374 = vmatpush1.msra.mxu0 %v264
    %375 = vmatprep.subr.mxu0 0.0
    %376 = vmatpush1.msra.mxu0 %v265
    %377 = vmatprep.subr.mxu0 0.0
    %378 = vmatpush1.msra.mxu0 %v266
    %379 = vmatprep.subr.mxu0 0.0
    %380 = vmatpush1.msra.mxu0 %v267
    %381 = vmatprep.subr.mxu0 0.0
    %382 = vmatpush1.msra.mxu0 %v268
    %383 = vmatprep.subr.mxu0 0.0
    %384 = vmatpush1.msra.mxu0 %v269
    %385 = vmatprep.subr.mxu0 0.0
    %386 = vmatpush1.msra.mxu0 0.0
    %387 = vmatprep.subr.mxu0 0.0
    %388 = vmatpush1.msra.mxu0 0.0
    %389 = vmatprep.subr.mxu0 0.0
    %390 = vmatpush1.msra.mxu0 0.0
    %391 = vmatprep.subr.mxu0 0.0
    %392 = vmatpush1.msra.mxu0 0.0
    %393 = vmatprep.subr.mxu0 0.0
    %394 = vmatpush1.msra.mxu0 0.0
    %395 = vmatprep.subr.mxu0 0.0
    %396 = vmatpush1.msra.mxu0 0.0
    %397 = vmatprep.subr.mxu0 0.0
    %398 = vmatpush1.msra.mxu0 0.0
    %399 = vmatprep.subr.mxu0 0.0
    %400 = vmatpush1.msra.mxu0 0.0
    %401 = vmatprep.subr.mxu0 0.0
    %402 = vmatpush1.msra.mxu0 0.0
    %403 = vmatprep.subr.mxu0 0.0
    %404 = vmatpush1.msra.mxu0 0.0
    %405 = vmatprep.subr.mxu0 0.0
    %406 = vmatpush1.msra.mxu0 0.0
    %407 = vmatprep.subr.mxu0 0.0
    %408 = vmatpush1.msra.mxu0 0.0
    %409 = vmatprep.subr.mxu0 0.0
    %410 = vmatpush1.msra.mxu0 0.0
    %411 = vmatprep.subr.mxu0 0.0
    %412 = vmatpush1.msra.mxu0 0.0
    %413 = vmatprep.subr.mxu0 0.0
    %414 = vmatpush1.msra.mxu0 0.0
    %415 = vmatprep.subr.mxu0 0.0
    %416 = vmatpush1.msra.mxu0 0.0
    %417 = vmatprep.mubr.f32.mxu0 0.0
    %418 = vmatmul.mubr.f32.gmra.mrb[0].mxu0 %v252
    %v419 = vpop.f32.mrb[0].mxu0
    %v420 = vadd.f32 %v274, %v419
    %v421 = vpop.f32.mrb[0].mxu0
    %422 = vmatprep.mubr.f32.mxu0 0.0
    %423 = vmatmul.mubr.f32.gmra.mrb[0].mxu0 %v253
    %v424 = vpop.f32.mrb[0].mxu0
    %v425 = vadd.f32 %v274, %v424
    %v426 = vpop.f32.mrb[0].mxu0
    %427 = vdwg.mxu0
    %v428 = vmax.f32 %v420, 0.0
    %v429 = vmax.f32 %v425, 0.0
    %v430 = vld [vmem:[%s6] sm:$0x1]
    %v432 = vlaneseq
    %v433 = vshrl.u32 %v432, 7
    %v434 = vsub.s32 0, %v433
    %v435 = vrot.slane %v430, %v434
    %v437 = vmul.f32 %v428, %v435
    %v438 = vmul.f32 %v429, %v435
    %439 = vadd.xlane.f32.xlu0 %v437
    %v440 = vpop.xlane.xlu0 %439
    %441 = vadd.xlane.f32.xlu0 %v438
    %v442 = vpop.xlane.xlu0 %441
    %s443 = sadd.s32 %s59, 16
    %p444 = scmp.le.s32.totalorder %s443, 16
    // Predicated region
    $region38: #{mine_forward.1} parent=36 // pred_check
      %p445 = pneg %p444
    $region39: #{mine_forward.1} parent=36 // pred_check_branch
      %447 = sbr.rel (%p445) target = $region41
    $region40: #{mine_forward.1} parent=36 // pred_region
      %v448 = vld [vmem:[#allocation2] sm:$0x1]
      %v449 = vadd.f32 %v351, %v352
      %v450 = vrot.slane %v449, 4
      %v451 = vadd.f32 %v449, %v450
      %v452 = vrot.slane %v451, 2
      %v453 = vadd.f32 %v451, %v452
      %v454 = vrot.slane %v453, 1
      %v455 = vadd.f32 %v453, %v454
      %v456 = vadd.f32 %v448, %v455
      %457 = vst [vmem:[#allocation2] sm:$0x1] %v456
      %v458 = vld [vmem:[#allocation3] sm:$0x1]
      %v459 = vmax.f32 %v440, %v442
      %v460 = vrot.slane %v459, 4
      %v461 = vmax.f32 %v459, %v460
      %v462 = vrot.slane %v461, 2
      %v463 = vmax.f32 %v461, %v462
      %v464 = vrot.slane %v463, 1
      %v465 = vmax.f32 %v463, %v464
      %v466 = vmax.f32 %v458, %v465
      %vm467 = vcmp.eq.f32.partialorder %v458, -inf
      %v468 = vsub.f32 %v458, %v466
      %v469 = vmul.f32 %v468, 1.442695
      %v470 = vpow.pop %v469
      %v471 = vsel %vm467, 0.0, %v470
      %v473 = vlaneseq
      %v474 = vshrl.u32 %v473, 7
      %v475 = vsub.s32 0, %v474
      %v476 = vrot.slane %v466, %v475
      %v478 = vsub.f32 %v440, %v476
      %v479 = vsub.f32 %v442, %v476
      %v480 = vmul.f32 %v478, 1.442695
      %v481 = vpow.pop %v480
      %v482 = vmul.f32 %v479, 1.442695
      %v483 = vpow.pop %v482
      %vm484 = vcmask 7168
      %v485 = vsel %vm484, %v481, 0.0
      %v486 = vsel %vm484, %v483, 0.0
      %v487 = vadd.f32 %v485, %v486
      %v488 = vrot.slane %v487, 4
      %v489 = vadd.f32 %v487, %v488
      %v490 = vrot.slane %v489, 2
      %v491 = vadd.f32 %v489, %v490
      %v492 = vrot.slane %v491, 1
      %v493 = vadd.f32 %v491, %v492
      %v494 = vld [vmem:[#allocation4] sm:$0x1]
      %v495 = vmul.f32 %v494, %v471
      %v496 = vadd.f32 %v495, %v493
      %vm497 = vcmask 0
      %498 = vst.msk [vmem:[#allocation4] sm:$0x1] %vm497, %v496
      %499 = vst.msk [vmem:[#allocation3] sm:$0x1] %vm497, %v466
    $region41: #{mine_forward.1} parent=36 // pred_fallthru
      _
    %p500 = scmp.gt.s32.totalorder %s443, 16
    // Predicated region
    $region42: #{mine_forward.1} parent=36 // pred_check
      %p501 = pneg %p500
    $region43: #{mine_forward.1} parent=36 // pred_check_branch
      %503 = sbr.rel (%p501) target = $region45
    $region44: #{mine_forward.1} parent=36 // pred_region
      %v504 = vlaneseq
      %v505 = vshrl.u32 %v504, 7
      %v506 = vadd.s32 %v505, 8
      %v507 = vstv %s59
      %v508 = vadd.s32 %v507, %v505
      %v509 = vadd.s32 %v507, %v506
      %vm510 = vcmp.lt.s32.totalorder %v508, 16
      %vm511 = vcmp.lt.s32.totalorder %v509, 16
      %v512 = vld [vmem:[#allocation2] sm:$0x1]
      %v513 = vsel %vm510, 1, 0
      %v514 = vsel %vm511, 1, 0
      %vm515 = vcmp.eq.s32.totalorder %v513, 1
      %vm516 = vcmp.eq.s32.totalorder %v514, 1
      %v517 = vsel %vm515, %v351, 0.0
      %v518 = vsel %vm516, %v352, 0.0
      %v519 = vadd.f32 %v517, %v518
      %v520 = vrot.slane %v519, 4
      %v521 = vadd.f32 %v519, %v520
      %v522 = vrot.slane %v521, 2
      %v523 = vadd.f32 %v521, %v522
      %v524 = vrot.slane %v523, 1
      %v525 = vadd.f32 %v523, %v524
      %v526 = vadd.f32 %v512, %v525
      %527 = vst [vmem:[#allocation2] sm:$0x1] %v526
      %v528 = vsel %vm510, %v440, -inf
      %v529 = vsel %vm511, %v442, -inf
      %v530 = vld [vmem:[#allocation3] sm:$0x1]
      %v531 = vmax.f32 %v528, %v529
      %v532 = vrot.slane %v531, 4
      %v533 = vmax.f32 %v531, %v532
      %v534 = vrot.slane %v533, 2
      %v535 = vmax.f32 %v533, %v534
      %v536 = vrot.slane %v535, 1
      %v537 = vmax.f32 %v535, %v536
      %v538 = vmax.f32 %v530, %v537
      %vm539 = vcmp.eq.f32.partialorder %v530, -inf
      %v540 = vsub.f32 %v530, %v538
      %v541 = vmul.f32 %v540, 1.442695
      %v542 = vpow.pop %v541
      %v543 = vsel %vm539, 0.0, %v542
      %v545 = vlaneseq
      %v546 = vshrl.u32 %v545, 7
      %v547 = vsub.s32 0, %v546
      %v548 = vrot.slane %v538, %v547
      %v550 = vsub.f32 %v528, %v548
      %v551 = vsub.f32 %v529, %v548
      %v552 = vmul.f32 %v550, 1.442695
      %v553 = vpow.pop %v552
      %v554 = vmul.f32 %v551, 1.442695
      %v555 = vpow.pop %v554
      %vm556 = vcmask 7168
      %v557 = vsel %vm556, %v553, 0.0
      %v558 = vsel %vm556, %v555, 0.0
      %v559 = vadd.f32 %v557, %v558
      %v560 = vrot.slane %v559, 4
      %v561 = vadd.f32 %v559, %v560
      %v562 = vrot.slane %v561, 2
      %v563 = vadd.f32 %v561, %v562
      %v564 = vrot.slane %v563, 1
      %v565 = vadd.f32 %v563, %v564
      %v566 = vld [vmem:[#allocation4] sm:$0x1]
      %v567 = vmul.f32 %v566, %v543
      %v568 = vadd.f32 %v567, %v565
      %vm569 = vcmask 0
      %570 = vst.msk [vmem:[#allocation4] sm:$0x1] %vm569, %v568
      %571 = vst.msk [vmem:[#allocation3] sm:$0x1] %vm569, %v538
    $region45: #{mine_forward.1} parent=36 // pred_fallthru
      _
  $region37: #{mine_forward.1} parent=0 // pred_fallthru
    _
  // Predicated region
  $region46: #{mine_forward.1} parent=0 // pred_check
    %p572 = pneg %p60
  $region47: #{mine_forward.1} parent=0 // pred_check_branch
    %574 = sbr.rel (%p572) target = $region49
  $region48: #{mine_forward.1} parent=0 // pred_region
    %v575 = vld [vmem:[#allocation2] sm:$0x1]
    %v576 = vld [vmem:[%s6] sm:$0x1]
    %v577 = vmul.f32 %v575, %v576
    %vm578 = vcmask 1040384
    %v579 = vsel %vm578, %v577, 0.0
    %580 = vadd.xlane.f32.xlu0 %v579
    %v581 = vpop.xlane.xlu0 %580
    %v582 = vlaneseq
    %v583 = vand.u32 %v582, 127
    %vm584 = vcmp.eq.s32.totalorder %v583, 0
    %vm585 = vcmp.eq.s32.totalorder %v583, 1
    %v586 = vld [vmem:[#allocation3] sm:$0x1]
    %vm587 = vcmp.eq.s32.totalorder %v583, 2
    %v588 = vld [vmem:[#allocation4] sm:$0x1]
    %590 = vset.pattern.permute.xlu0 0
    %591 = vperm.xlu0 %590, %v588
    %v592 = vpop.permute.xlu0 %591
    %v594 = vlaneseq
    %v595 = vshrl.u32 %v594, 7
    %v596 = vsub.s32 0, %v595
    %v597 = vrot.slane %v592, %v596
    %v598 = vsel %vm587, %v597, 0.0
    %600 = vset.pattern.permute.xlu0 0
    %601 = vperm.xlu0 %600, %v586
    %v602 = vpop.permute.xlu0 %601
    %v604 = vlaneseq
    %v605 = vshrl.u32 %v604, 7
    %v606 = vsub.s32 0, %v605
    %v607 = vrot.slane %v602, %v606
    %v608 = vsel %vm585, %v607, %v598
    %v609 = vsel %vm584, %v581, %v608
    %610 = vst [vmem:[%s7] sm:$0x1] %v609
  $region49: #{mine_forward.1} parent=0 // pred_fallthru
    _
  // Predicated region
  $region50: #{mine_forward.1} parent=0 // pred_check
    _
  $region51: #{mine_forward.1} parent=0 // pred_check_branch
    %612 = sbr.rel (0) target = $region53
  $region52: #{mine_forward.1} parent=0 // pred_region
    _
  $region53: #{mine_forward.1} parent=0 // pred_fallthru
    _
  // Predicated region
  $region54: #{mine_forward.1} parent=0 // pred_check
    _
  $region55: #{mine_forward.1} parent=0 // pred_check_branch
    %614 = sbr.rel (0) target = $region57
  $region56: #{mine_forward.1} parent=0 // pred_region
    _
  $region57: #{mine_forward.1} parent=0 // pred_fallthru
    _

</llo_original>
